<compile_context>
chip_gen: v6e
topology: v6e:2x2x1
jax: 0.10.0
libtpu: 0.0.40
codegen_flags: <defaults>
</compile_context>

<pallas_src>
import jax
import jax.numpy as jnp
from jax.experimental import pallas as pl
from jax.experimental.pallas import tpu as pltpu


def _linear_kernel(x_ref, w_ref, b_ref, o_ref):
    k = pl.program_id(0)

    # x tile: (B, tile_k), w tile: (N, tile_k); contract on the last (lane)
    # axis of both -> (B, N) partial product, accumulated in f32.
    partial = jax.lax.dot_general(
        x_ref[...],
        w_ref[...],
        dimension_numbers=(((1,), (1,)), ((), ())),
        preferred_element_type=jnp.float32,
    )

    @pl.when(k == 0)
    def _():
        o_ref[...] = jnp.zeros_like(o_ref)

    # Output block is resident across the K (reduction) axis: accumulate here.
    o_ref[...] += partial.astype(o_ref.dtype)

    @pl.when(k == pl.num_programs(0) - 1)
    def _():
        # Fused bias add on the already-resident (B, N) vregs.
        o_ref[...] += b_ref[...].astype(o_ref.dtype)


def _pick_tile_k(K, budget_bytes):
    """Largest K tile that (a) divides K with no padding, (b) is lane-aligned
    (or the full K), and (c) keeps the double-buffered, sublane-padded f32
    working set under `budget_bytes`."""
    # Both input tiles are sublane-padded to 8 rows; double-buffered; f32.
    per_k_bytes = 2 * (8 + 8) * 4

    if per_k_bytes * K <= budget_bytes:
        return K  # single grid step, no padding (covers the real K = 122880)

    for steps in range(2, 257):
        if K % steps == 0:
            t = K // steps
            if t % 128 == 0 and per_k_bytes * t <= budget_bytes:
                return t

    # Fallback (not reachable for this module's shapes): lane-aligned tile,
    # K gets zero-padded in the wrapper.
    return max(128, (budget_bytes // per_k_bytes) // 128 * 128)


def linear_classifier_forward(x, weight, bias, *, vmem_budget_bytes=32 * 1024 * 1024):
    """Forward of nn.Linear: x (B, K) f32, weight (N, K) f32 (PyTorch layout),
    bias (N,) f32 -> (B, N) f32."""
    x = jnp.asarray(x, jnp.float32)
    weight = jnp.asarray(weight, jnp.float32)
    bias = jnp.asarray(bias, jnp.float32)

    B, K = x.shape
    N, K_w = weight.shape
    assert K == K_w, "weight inner dim must match x"

    tile_k = _pick_tile_k(K, vmem_budget_bytes)
    num_steps = pl.cdiv(K, tile_k)
    K_pad = num_steps * tile_k
    if K_pad != K:
        # TODO(synk): only reachable when K has no lane-aligned divisor fitting
        # VMEM; if ever hit, pad the weight once at model init, not per call.
        x = jnp.pad(x, ((0, 0), (0, K_pad - K)))
        weight = jnp.pad(weight, ((0, 0), (0, K_pad - K)))

    bias2d = bias.reshape(1, N)

    return pl.pallas_call(
        _linear_kernel,
        out_shape=jax.ShapeDtypeStruct((B, N), jnp.float32),
        grid_spec=pltpu.PrefetchScalarGridSpec(
            num_scalar_prefetch=0,
            grid=(num_steps,),
            in_specs=[
                pl.BlockSpec((B, tile_k), lambda k: (0, k)),  # x K-tile
                pl.BlockSpec((N, tile_k), lambda k: (0, k)),  # weight K-tile (N, K layout)
                pl.BlockSpec((1, N), lambda k: (0, 0)),       # bias (constant block)
            ],
            out_specs=pl.BlockSpec((B, N), lambda k: (0, 0)),  # resident accumulator
        ),
        compiler_params=pltpu.CompilerParams(
            dimension_semantics=("arbitrary",),   # K is a reduction axis
            vmem_limit_bytes=48 * 1024 * 1024,    # clears v5e's 16 MiB default
        ),
    )(x, weight, bias2d)


if __name__ == "__main__":
    # Small shapes consistent with the module: (batch, input_dim) -> (batch, output_dim)
    batch = 4
    input_dim = 4096   # scaled-down stand-in for the default 122880
    output_dim = 3

    key = jax.random.PRNGKey(0)
    kx, kw, kb = jax.random.split(key, 3)

    x = jax.random.normal(kx, (batch, input_dim), dtype=jnp.float32)
    # Deterministic nn.Linear-style init (uniform bound 1/sqrt(K))
    bound = 1.0 / (input_dim ** 0.5)
    weight = jax.random.uniform(
        kw, (output_dim, input_dim), minval=-bound, maxval=bound, dtype=jnp.float32
    )
    bias = jax.random.uniform(
        kb, (output_dim,), minval=-bound, maxval=bound, dtype=jnp.float32
    )

    ref = x @ weight.T + bias

    # Default path: single grid step (matches the real K = 122880 regime).
    out_single = linear_classifier_forward(x, weight, bias)
    out_single = jax.block_until_ready(out_single)
    assert out_single.shape == (batch, output_dim)
    assert jnp.allclose(out_single, ref, atol=1e-4, rtol=1e-4)

    # Tiny VMEM budget to also exercise the multi-step K accumulation path
    # (here: 2 steps of tile_k = 2048), still with zero K padding.
    out_multi = linear_classifier_forward(x, weight, bias, vmem_budget_bytes=256 * 1024)
    out_multi = jax.block_until_ready(out_multi)
    assert jnp.allclose(out_multi, ref, atol=1e-4, rtol=1e-4)

    print("KERNEL_OK")
</pallas_src>

<mosaic_0001>
module attributes {stable_mosaic.version = 11 : i64} {
  func.func @_linear_kernel(%arg0: i32, %arg1: memref<4x4096xf32, #tpu.memory_space<vmem>>, %arg2: memref<3x4096xf32, #tpu.memory_space<vmem>>, %arg3: memref<1x3xf32, #tpu.memory_space<vmem>>, %arg4: memref<4x3xf32, #tpu.memory_space<vmem>>) attributes {dimension_semantics = [#tpu.dimension_semantics<arbitrary>], iteration_bounds = array<i64: 1>, scalar_prefetch = 0 : i64, scratch_operands = 0 : i64, tpu.core_type = #tpu.core_type<tc>, window_params = [{transform_indices = @transform_0, window_bounds = array<i64: 4, 4096>}, {transform_indices = @transform_1, window_bounds = array<i64: 3, 4096>}, {pipeline_mode = #tpu.pipeline_mode<synchronous>, transform_indices = @transform_2, window_bounds = array<i64: 1, 3>}, {pipeline_mode = #tpu.pipeline_mode<synchronous>, transform_indices = @transform_3, window_bounds = array<i64: 4, 3>}]} {
    %c0 = arith.constant 0 : index
    %c0_0 = arith.constant 0 : index
    %0 = vector.load %arg1[%c0, %c0_0] : memref<4x4096xf32, #tpu.memory_space<vmem>>, vector<4x4096xf32>
    %c0_1 = arith.constant 0 : index
    %c0_2 = arith.constant 0 : index
    %1 = vector.load %arg2[%c0_1, %c0_2] : memref<3x4096xf32, #tpu.memory_space<vmem>>, vector<3x4096xf32>
    %cst = arith.constant dense<0.000000e+00> : vector<4x3xf32>
    %2 = tpu.matmul %0, %1, %cst {dimension_numbers = #tpu.dot_dimension_numbers<[1], [1], [0], [0], [0, 0, 1, 0], [], []>} : vector<4x4096xf32>, vector<3x4096xf32>, vector<4x3xf32> -> vector<4x3xf32>
    %c0_i32 = arith.constant 0 : i32
    %3 = arith.cmpi eq, %arg0, %c0_i32 : i32
    %4 = arith.extui %3 : i1 to i32
    %c0_i32_3 = arith.constant 0 : i32
    %5 = arith.cmpi ne, %4, %c0_i32_3 : i32
    scf.if %5 {
      %cst_10 = arith.constant 0.000000e+00 : f32
      %12 = vector.broadcast %cst_10 : f32 to vector<4x3xf32>
      %c0_11 = arith.constant 0 : index
      %c0_12 = arith.constant 0 : index
      %13 = vector.load %arg4[%c0_11, %c0_12] : memref<4x3xf32, #tpu.memory_space<vmem>>, vector<4x3xf32>
      tpu.vector_store %arg4[%c0_11, %c0_12], %12 {strides = array<i32>} : memref<4x3xf32, #tpu.memory_space<vmem>>, vector<4x3xf32>,
    } else {
    }
    %c0_4 = arith.constant 0 : index
    %c0_5 = arith.constant 0 : index
    %6 = vector.load %arg4[%c0_4, %c0_5] : memref<4x3xf32, #tpu.memory_space<vmem>>, vector<4x3xf32>
    %7 = arith.addf %6, %2 : vector<4x3xf32>
    %c0_6 = arith.constant 0 : index
    %c0_7 = arith.constant 0 : index
    %8 = vector.load %arg4[%c0_6, %c0_7] : memref<4x3xf32, #tpu.memory_space<vmem>>, vector<4x3xf32>
    tpu.vector_store %arg4[%c0_6, %c0_7], %7 {strides = array<i32>} : memref<4x3xf32, #tpu.memory_space<vmem>>, vector<4x3xf32>,
    %c0_i32_8 = arith.constant 0 : i32
    %9 = arith.cmpi eq, %arg0, %c0_i32_8 : i32
    %10 = arith.extui %9 : i1 to i32
    %c0_i32_9 = arith.constant 0 : i32
    %11 = arith.cmpi ne, %10, %c0_i32_9 : i32
    scf.if %11 {
      %c0_10 = arith.constant 0 : index
      %c0_11 = arith.constant 0 : index
      %12 = vector.load %arg4[%c0_10, %c0_11] : memref<4x3xf32, #tpu.memory_space<vmem>>, vector<4x3xf32>
      %c0_12 = arith.constant 0 : index
      %c0_13 = arith.constant 0 : index
      %13 = vector.load %arg3[%c0_12, %c0_13] : memref<1x3xf32, #tpu.memory_space<vmem>>, vector<1x3xf32>
      %14 = vector.broadcast %13 : vector<1x3xf32> to vector<4x3xf32>
      %15 = arith.addf %12, %14 : vector<4x3xf32>
      %c0_14 = arith.constant 0 : index
      %c0_15 = arith.constant 0 : index
      %16 = vector.load %arg4[%c0_14, %c0_15] : memref<4x3xf32, #tpu.memory_space<vmem>>, vector<4x3xf32>
      tpu.vector_store %arg4[%c0_14, %c0_15], %15 {strides = array<i32>} : memref<4x3xf32, #tpu.memory_space<vmem>>, vector<4x3xf32>,
    } else {
    }
    return
  }
  func.func @transform_0(%arg0: i32) -> (i32, i32) {
    %c0_i32 = arith.constant 0 : i32
    %c0_i32_0 = arith.constant 0 : i32
    return %c0_i32, %arg0 : i32, i32
  }
  func.func @transform_1(%arg0: i32) -> (i32, i32) {
    %c0_i32 = arith.constant 0 : i32
    %c0_i32_0 = arith.constant 0 : i32
    return %c0_i32, %arg0 : i32, i32
  }
  func.func @transform_2(%arg0: i32) -> (i32, i32) {
    %c0_i32 = arith.constant 0 : i32
    %c0_i32_0 = arith.constant 0 : i32
    %c0_i32_1 = arith.constant 0 : i32
    return %c0_i32, %c0_i32_0 : i32, i32
  }
  func.func @transform_3(%arg0: i32) -> (i32, i32) {
    %c0_i32 = arith.constant 0 : i32
    %c0_i32_0 = arith.constant 0 : i32
    %c0_i32_1 = arith.constant 0 : i32
    return %c0_i32, %c0_i32_0 : i32, i32
  }
}

</mosaic_0001>

<llo_original>
// kernel: tpu_custom_call.1
$region0: #{tpu_custom_call.1}
  #allocation0 [shape = 'u32[]', space=smem, size = 0x4, offset = 0x4, fixed_abs, tag = 'smem constant byte address 0x4 - core index']
  #allocation1 [shape = 'u32[144,128]{1,0:T(1,128)}', space=vmem, size = 0x12000, scoped, tag = 'internal scratch']
  %s0 = inlined_call_operand.hbm [shape: f32[4,4096], index: 0, kind: input, shape index: {}]
  %s1 = inlined_call_operand.hbm [shape: f32[3,4096], index: 1, kind: input, shape index: {}]
  %s2 = inlined_call_operand.vmem [shape: f32[1,3], index: 2, kind: input, shape index: {}]
  %s3 = inlined_call_operand.hbm [shape: f32[4,3], index: 3, kind: output, shape index: {}]
  %s4 = sld [smem:[#allocation0]]
  $region38: #{tpu_custom_call.1} parent=0
    _
  %s6 = ssub.s32 1, %s4
  %s7 = scalar_select 0, %s6, %s4
  $region1: #{tpu_custom_call.1} parent=0
    #allocation2 [shape = 'u8[65536]{0}', space=vmem, size = 0x10000, scoped, tag = 'input window, operand 0, single buffered']
    #allocation3 [shape = 's32[1]{0}', space=sflag, size = 0x4, scoped, tag = 'scoped memory for tpu_custom_call.1']
    #allocation4 [shape = 's32[1]{0}', space=sflag, size = 0x4, scoped, tag = 'scoped memory for tpu_custom_call.1']
    #allocation5 [shape = 'u8[65536]{0}', space=vmem, size = 0x10000, scoped, tag = 'input window, operand 1, single buffered']
    #allocation6 [shape = 's32[1]{0}', space=sflag, size = 0x4, scoped, tag = 'scoped memory for tpu_custom_call.1']
    #allocation7 [shape = 'u8[2048]{0}', space=vmem, size = 0x800, scoped, tag = 'output window, operand 0, single buffered']
    %8 = vsyncpa [#allocation3], 0
    %9 = vsyncpa [#allocation6], 0
    %10 = vsyncpa [#allocation4], 0
    // Predicated region
    $region2: #{tpu_custom_call.1} parent=1 // pred_check
      _
    $region3: #{tpu_custom_call.1} parent=1 // pred_check_branch
      %12 = sbr.rel (0) target = $region5
    $region4: #{tpu_custom_call.1} parent=1 // pred_region
      %s14 = ssub.s32 2048, 2048
      %15 = vsyncadd [#allocation3], %s14
      %s17 = sshll.u32 [#allocation2], 4
      %s18 = int_to_ptr.vmem [resolvable:$true] %s17
      %20 = dma.hbm_to_vmem [thread:$0]  %s0, 2048, %s18, [#allocation3]
    $region5: #{tpu_custom_call.1} parent=1 // pred_fallthru
      _
    // Predicated region
    $region6: #{tpu_custom_call.1} parent=1 // pred_check
      _
    $region7: #{tpu_custom_call.1} parent=1 // pred_check_branch
      %22 = sbr.rel (0) target = $region9
    $region8: #{tpu_custom_call.1} parent=1 // pred_region
      %s24 = ssub.s32 2048, 2048
      %25 = vsyncadd [#allocation6], %s24
      %s27 = sshll.u32 [#allocation5], 4
      %s28 = int_to_ptr.vmem [resolvable:$true] %s27
      %30 = dma.hbm_to_vmem [thread:$0]  %s1, 2048, %s28, [#allocation6]
    $region9: #{tpu_custom_call.1} parent=1 // pred_fallthru
      _
    // Predicated region
    $region10: #{tpu_custom_call.1} parent=1 // pred_check
      _
    $region11: #{tpu_custom_call.1} parent=1 // pred_check_branch
      %32 = sbr.rel (0) target = $region13
    $region12: #{tpu_custom_call.1} parent=1 // pred_region
      _
    $region13: #{tpu_custom_call.1} parent=1 // pred_fallthru
      _
    // Predicated region
    $region14: #{tpu_custom_call.1} parent=1 // pred_check
      _
    $region15: #{tpu_custom_call.1} parent=1 // pred_check_branch
      %34 = sbr.rel (0) target = $region17
    $region16: #{tpu_custom_call.1} parent=1 // pred_region
      %35 = dma.done [#allocation3], 2048
    $region17: #{tpu_custom_call.1} parent=1 // pred_fallthru
      _
    // Predicated region
    $region18: #{tpu_custom_call.1} parent=1 // pred_check
      _
    $region19: #{tpu_custom_call.1} parent=1 // pred_check_branch
      %37 = sbr.rel (0) target = $region21
    $region20: #{tpu_custom_call.1} parent=1 // pred_region
      %38 = dma.done [#allocation6], 2048
    $region21: #{tpu_custom_call.1} parent=1 // pred_fallthru
      _
    %v39 = vld [vmem:[#allocation2] sm:$0xff]
    %v40 = vld [vmem:[#allocation2 + $0x8] sm:$0xff]
    %v41 = vld [vmem:[#allocation2 + $0x10] sm:$0xff]
    %v42 = vld [vmem:[#allocation2 + $0x18] sm:$0xff]
    %v43 = vld [vmem:[#allocation2 + $0x20] sm:$0xff]
    %v44 = vld [vmem:[#allocation2 + $0x28] sm:$0xff]
    %v45 = vld [vmem:[#allocation2 + $0x30] sm:$0xff]
    %v46 = vld [vmem:[#allocation2 + $0x38] sm:$0xff]
    %v47 = vld [vmem:[#allocation2 + $0x40] sm:$0xff]
    %v48 = vld [vmem:[#allocation2 + $0x48] sm:$0xff]
    %v49 = vld [vmem:[#allocation2 + $0x50] sm:$0xff]
    %v50 = vld [vmem:[#allocation2 + $0x58] sm:$0xff]
    %v51 = vld [vmem:[#allocation2 + $0x60] sm:$0xff]
    %v52 = vld [vmem:[#allocation2 + $0x68] sm:$0xff]
    %v53 = vld [vmem:[#allocation2 + $0x70] sm:$0xff]
    %v54 = vld [vmem:[#allocation2 + $0x78] sm:$0xff]
    %v55 = vld [vmem:[#allocation5] sm:$0x77]
    %v56 = vld [vmem:[#allocation5 + $0x8] sm:$0x77]
    %v57 = vld [vmem:[#allocation5 + $0x10] sm:$0x77]
    %v58 = vld [vmem:[#allocation5 + $0x18] sm:$0x77]
    %v59 = vld [vmem:[#allocation5 + $0x20] sm:$0x77]
    %v60 = vld [vmem:[#allocation5 + $0x28] sm:$0x77]
    %v61 = vld [vmem:[#allocation5 + $0x30] sm:$0x77]
    %v62 = vld [vmem:[#allocation5 + $0x38] sm:$0x77]
    %v63 = vld [vmem:[#allocation5 + $0x40] sm:$0x77]
    %v64 = vld [vmem:[#allocation5 + $0x48] sm:$0x77]
    %v65 = vld [vmem:[#allocation5 + $0x50] sm:$0x77]
    %v66 = vld [vmem:[#allocation5 + $0x58] sm:$0x77]
    %v67 = vld [vmem:[#allocation5 + $0x60] sm:$0x77]
    %v68 = vld [vmem:[#allocation5 + $0x68] sm:$0x77]
    %v69 = vld [vmem:[#allocation5 + $0x70] sm:$0x77]
    %v70 = vld [vmem:[#allocation5 + $0x78] sm:$0x77]
    %v87 = vcombine.high %v39, %v39
    %v88 = vcombine.high %v40, %v40
    %v89 = vcombine.high %v41, %v41
    %v90 = vcombine.high %v42, %v42
    %v91 = vcombine.high %v43, %v43
    %v92 = vcombine.high %v44, %v44
    %v93 = vcombine.high %v45, %v45
    %v94 = vcombine.high %v46, %v46
    %v95 = vcombine.high %v47, %v47
    %v96 = vcombine.high %v48, %v48
    %v97 = vcombine.high %v49, %v49
    %v98 = vcombine.high %v50, %v50
    %v99 = vcombine.high %v51, %v51
    %v100 = vcombine.high %v52, %v52
    %v101 = vcombine.high %v53, %v53
    %v102 = vcombine.high %v54, %v54
    %v135 = vcombine.high %v55, %v55
    %v136 = vcombine.high %v56, %v56
    %v137 = vcombine.high %v57, %v57
    %v138 = vcombine.high %v58, %v58
    %v139 = vcombine.high %v59, %v59
    %v140 = vcombine.high %v60, %v60
    %v141 = vcombine.high %v61, %v61
    %v142 = vcombine.high %v62, %v62
    %v143 = vcombine.high %v63, %v63
    %v144 = vcombine.high %v64, %v64
    %v145 = vcombine.high %v65, %v65
    %v146 = vcombine.high %v66, %v66
    %v147 = vcombine.high %v67, %v67
    %v148 = vcombine.high %v68, %v68
    %v149 = vcombine.high %v69, %v69
    %v150 = vcombine.high %v70, %v70
    %167 = vmatprep.subr.mxu0 0.0
    %168 = vmatpush1.xpose.msra.mxu0 0.0
    %169 = vmatprep.subr.mxu0 0.0
    %170 = vmatpush1.xpose.msra.mxu0 0.0
    %171 = vmatprep.subr.mxu0 0.0
    %172 = vmatpush1.xpose.msra.mxu0 0.0
    %173 = vmatprep.subr.mxu0 0.0
    %174 = vmatpush1.xpose.msra.mxu0 0.0
    %175 = vmatprep.subr.mxu0 0.0
    %176 = vmatpush1.xpose.msra.mxu0 0.0
    %177 = vmatprep.subr.mxu0 0.0
    %178 = vmatpush1.xpose.msra.mxu0 0.0
    %179 = vmatprep.subr.mxu0 0.0
    %180 = vmatpush1.xpose.msra.mxu0 0.0
    %181 = vmatprep.subr.mxu0 0.0
    %182 = vmatpush1.xpose.msra.mxu0 0.0
    %183 = vmatprep.subr.mxu0 0.0
    %184 = vmatpush1.xpose.msra.mxu0 0.0
    %185 = vmatprep.subr.mxu0 0.0
    %186 = vmatpush1.xpose.msra.mxu0 0.0
    %187 = vmatprep.subr.mxu0 0.0
    %188 = vmatpush1.xpose.msra.mxu0 0.0
    %189 = vmatprep.subr.mxu0 0.0
    %190 = vmatpush1.xpose.msra.mxu0 0.0
    %191 = vmatprep.subr.mxu0 0.0
    %192 = vmatpush1.xpose.msra.mxu0 0.0
    %193 = vmatprep.subr.mxu0 0.0
    %194 = vmatpush1.xpose.msra.mxu0 0.0
    %195 = vmatprep.subr.mxu0 0.0
    %196 = vmatpush1.xpose.msra.mxu0 0.0
    %197 = vmatprep.subr.mxu0 %v135
    %198 = vmatpush1.xpose.msra.mxu0 %v55
    %199 = vmatprep.subr.mxu0 0.0
    %200 = vmatpush2.xpose.msra.mxu0 0.0
    %201 = vmatprep.subr.mxu0 0.0
    %202 = vmatpush2.xpose.msra.mxu0 0.0
    %203 = vmatprep.subr.mxu0 0.0
    %204 = vmatpush2.xpose.msra.mxu0 0.0
    %205 = vmatprep.subr.mxu0 0.0
    %206 = vmatpush2.xpose.msra.mxu0 0.0
    %207 = vmatprep.subr.mxu0 0.0
    %208 = vmatpush2.xpose.msra.mxu0 0.0
    %209 = vmatprep.subr.mxu0 0.0
    %210 = vmatpush2.xpose.msra.mxu0 0.0
    %211 = vmatprep.subr.mxu0 0.0
    %212 = vmatpush2.xpose.msra.mxu0 0.0
    %213 = vmatprep.subr.mxu0 0.0
    %214 = vmatpush2.xpose.msra.mxu0 0.0
    %215 = vmatprep.subr.mxu0 0.0
    %216 = vmatpush2.xpose.msra.mxu0 0.0
    %217 = vmatprep.subr.mxu0 0.0
    %218 = vmatpush2.xpose.msra.mxu0 0.0
    %219 = vmatprep.subr.mxu0 0.0
    %220 = vmatpush2.xpose.msra.mxu0 0.0
    %221 = vmatprep.subr.mxu0 0.0
    %222 = vmatpush2.xpose.msra.mxu0 0.0
    %223 = vmatprep.subr.mxu0 0.0
    %224 = vmatpush2.xpose.msra.mxu0 0.0
    %225 = vmatprep.subr.mxu0 0.0
    %226 = vmatpush2.xpose.msra.mxu0 0.0
    %227 = vmatprep.subr.mxu0 0.0
    %228 = vmatpush2.xpose.msra.mxu0 0.0
    %229 = vmatprep.subr.mxu0 0.0
    %230 = vmatpush2.xpose.msra.mxu0 0.0
    %231 = vmatprep.mubr.f32.mxu0 %v87
    %232 = vmatmul.mubr.f32.gmra.mxu0 %v39
    %v233 = vpop.f32.mrf.mxu0
    %v234 = vadd.f32 0.0, %v233
    %v235 = vpop.f32.mrf.mxu0
    %236 = vdwg.mxu0
    %237 = vmatprep.subr.mxu0 0.0
    %238 = vmatpush1.xpose.msra.mxu0 0.0
    %239 = vmatprep.subr.mxu0 0.0
    %240 = vmatpush1.xpose.msra.mxu0 0.0
    %241 = vmatprep.subr.mxu0 0.0
    %242 = vmatpush1.xpose.msra.mxu0 0.0
    %243 = vmatprep.subr.mxu0 0.0
    %244 = vmatpush1.xpose.msra.mxu0 0.0
    %245 = vmatprep.subr.mxu0 0.0
    %246 = vmatpush1.xpose.msra.mxu0 0.0
    %247 = vmatprep.subr.mxu0 0.0
    %248 = vmatpush1.xpose.msra.mxu0 0.0
    %249 = vmatprep.subr.mxu0 0.0
    %250 = vmatpush1.xpose.msra.mxu0 0.0
    %251 = vmatprep.subr.mxu0 0.0
    %252 = vmatpush1.xpose.msra.mxu0 0.0
    %253 = vmatprep.subr.mxu0 0.0
    %254 = vmatpush1.xpose.msra.mxu0 0.0
    %255 = vmatprep.subr.mxu0 0.0
    %256 = vmatpush1.xpose.msra.mxu0 0.0
    %257 = vmatprep.subr.mxu0 0.0
    %258 = vmatpush1.xpose.msra.mxu0 0.0
    %259 = vmatprep.subr.mxu0 0.0
    %260 = vmatpush1.xpose.msra.mxu0 0.0
    %261 = vmatprep.subr.mxu0 0.0
    %262 = vmatpush1.xpose.msra.mxu0 0.0
    %263 = vmatprep.subr.mxu0 0.0
    %264 = vmatpush1.xpose.msra.mxu0 0.0
    %265 = vmatprep.subr.mxu0 0.0
    %266 = vmatpush1.xpose.msra.mxu0 0.0
    %267 = vmatprep.subr.mxu0 %v136
    %268 = vmatpush1.xpose.msra.mxu0 %v56
    %269 = vmatprep.subr.mxu0 0.0
    %270 = vmatpush2.xpose.msra.mxu0 0.0
    %271 = vmatprep.subr.mxu0 0.0
    %272 = vmatpush2.xpose.msra.mxu0 0.0
    %273 = vmatprep.subr.mxu0 0.0
    %274 = vmatpush2.xpose.msra.mxu0 0.0
    %275 = vmatprep.subr.mxu0 0.0
    %276 = vmatpush2.xpose.msra.mxu0 0.0
    %277 = vmatprep.subr.mxu0 0.0
    %278 = vmatpush2.xpose.msra.mxu0 0.0
    %279 = vmatprep.subr.mxu0 0.0
    %280 = vmatpush2.xpose.msra.mxu0 0.0
    %281 = vmatprep.subr.mxu0 0.0
    %282 = vmatpush2.xpose.msra.mxu0 0.0
    %283 = vmatprep.subr.mxu0 0.0
    %284 = vmatpush2.xpose.msra.mxu0 0.0
    %285 = vmatprep.subr.mxu0 0.0
    %286 = vmatpush2.xpose.msra.mxu0 0.0
    %287 = vmatprep.subr.mxu0 0.0
    %288 = vmatpush2.xpose.msra.mxu0 0.0
    %289 = vmatprep.subr.mxu0 0.0
    %290 = vmatpush2.xpose.msra.mxu0 0.0
    %291 = vmatprep.subr.mxu0 0.0
    %292 = vmatpush2.xpose.msra.mxu0 0.0
    %293 = vmatprep.subr.mxu0 0.0
    %294 = vmatpush2.xpose.msra.mxu0 0.0
    %295 = vmatprep.subr.mxu0 0.0
    %296 = vmatpush2.xpose.msra.mxu0 0.0
    %297 = vmatprep.subr.mxu0 0.0
    %298 = vmatpush2.xpose.msra.mxu0 0.0
    %299 = vmatprep.subr.mxu0 0.0
    %300 = vmatpush2.xpose.msra.mxu0 0.0
    %301 = vmatprep.mubr.f32.mxu0 %v88
    %302 = vmatmul.mubr.f32.gmra.mxu0 %v40
    %v303 = vpop.f32.mrf.mxu0
    %v304 = vadd.f32 %v234, %v303
    %v305 = vpop.f32.mrf.mxu0
    %306 = vdwg.mxu0
    %307 = vmatprep.subr.mxu0 0.0
    %308 = vmatpush1.xpose.msra.mxu0 0.0
    %309 = vmatprep.subr.mxu0 0.0
    %310 = vmatpush1.xpose.msra.mxu0 0.0
    %311 = vmatprep.subr.mxu0 0.0
    %312 = vmatpush1.xpose.msra.mxu0 0.0
    %313 = vmatprep.subr.mxu0 0.0
    %314 = vmatpush1.xpose.msra.mxu0 0.0
    %315 = vmatprep.subr.mxu0 0.0
    %316 = vmatpush1.xpose.msra.mxu0 0.0
    %317 = vmatprep.subr.mxu0 0.0
    %318 = vmatpush1.xpose.msra.mxu0 0.0
    %319 = vmatprep.subr.mxu0 0.0
    %320 = vmatpush1.xpose.msra.mxu0 0.0
    %321 = vmatprep.subr.mxu0 0.0
    %322 = vmatpush1.xpose.msra.mxu0 0.0
    %323 = vmatprep.subr.mxu0 0.0
    %324 = vmatpush1.xpose.msra.mxu0 0.0
    %325 = vmatprep.subr.mxu0 0.0
    %326 = vmatpush1.xpose.msra.mxu0 0.0
    %327 = vmatprep.subr.mxu0 0.0
    %328 = vmatpush1.xpose.msra.mxu0 0.0
    %329 = vmatprep.subr.mxu0 0.0
    %330 = vmatpush1.xpose.msra.mxu0 0.0
    %331 = vmatprep.subr.mxu0 0.0
    %332 = vmatpush1.xpose.msra.mxu0 0.0
    %333 = vmatprep.subr.mxu0 0.0
    %334 = vmatpush1.xpose.msra.mxu0 0.0
    %335 = vmatprep.subr.mxu0 0.0
    %336 = vmatpush1.xpose.msra.mxu0 0.0
    %337 = vmatprep.subr.mxu0 %v137
    %338 = vmatpush1.xpose.msra.mxu0 %v57
    %339 = vmatprep.subr.mxu0 0.0
    %340 = vmatpush2.xpose.msra.mxu0 0.0
    %341 = vmatprep.subr.mxu0 0.0
    %342 = vmatpush2.xpose.msra.mxu0 0.0
    %343 = vmatprep.subr.mxu0 0.0
    %344 = vmatpush2.xpose.msra.mxu0 0.0
    %345 = vmatprep.subr.mxu0 0.0
    %346 = vmatpush2.xpose.msra.mxu0 0.0
    %347 = vmatprep.subr.mxu0 0.0
    %348 = vmatpush2.xpose.msra.mxu0 0.0
    %349 = vmatprep.subr.mxu0 0.0
    %350 = vmatpush2.xpose.msra.mxu0 0.0
    %351 = vmatprep.subr.mxu0 0.0
    %352 = vmatpush2.xpose.msra.mxu0 0.0
    %353 = vmatprep.subr.mxu0 0.0
    %354 = vmatpush2.xpose.msra.mxu0 0.0
    %355 = vmatprep.subr.mxu0 0.0
    %356 = vmatpush2.xpose.msra.mxu0 0.0
    %357 = vmatprep.subr.mxu0 0.0
    %358 = vmatpush2.xpose.msra.mxu0 0.0
    %359 = vmatprep.subr.mxu0 0.0
    %360 = vmatpush2.xpose.msra.mxu0 0.0
    %361 = vmatprep.subr.mxu0 0.0
    %362 = vmatpush2.xpose.msra.mxu0 0.0
    %363 = vmatprep.subr.mxu0 0.0
    %364 = vmatpush2.xpose.msra.mxu0 0.0
    %365 = vmatprep.subr.mxu0 0.0
    %366 = vmatpush2.xpose.msra.mxu0 0.0
    %367 = vmatprep.subr.mxu0 0.0
    %368 = vmatpush2.xpose.msra.mxu0 0.0
    %369 = vmatprep.subr.mxu0 0.0
    %370 = vmatpush2.xpose.msra.mxu0 0.0
    %371 = vmatprep.mubr.f32.mxu0 %v89
    %372 = vmatmul.mubr.f32.gmra.mxu0 %v41
    %v373 = vpop.f32.mrf.mxu0
    %v374 = vadd.f32 %v304, %v373
    %v375 = vpop.f32.mrf.mxu0
    %376 = vdwg.mxu0
    %377 = vmatprep.subr.mxu0 0.0
    %378 = vmatpush1.xpose.msra.mxu0 0.0
    %379 = vmatprep.subr.mxu0 0.0
    %380 = vmatpush1.xpose.msra.mxu0 0.0
    %381 = vmatprep.subr.mxu0 0.0
    %382 = vmatpush1.xpose.msra.mxu0 0.0
    %383 = vmatprep.subr.mxu0 0.0
    %384 = vmatpush1.xpose.msra.mxu0 0.0
    %385 = vmatprep.subr.mxu0 0.0
    %386 = vmatpush1.xpose.msra.mxu0 0.0
    %387 = vmatprep.subr.mxu0 0.0
    %388 = vmatpush1.xpose.msra.mxu0 0.0
    %389 = vmatprep.subr.mxu0 0.0
    %390 = vmatpush1.xpose.msra.mxu0 0.0
    %391 = vmatprep.subr.mxu0 0.0
    %392 = vmatpush1.xpose.msra.mxu0 0.0
    %393 = vmatprep.subr.mxu0 0.0
    %394 = vmatpush1.xpose.msra.mxu0 0.0
    %395 = vmatprep.subr.mxu0 0.0
    %396 = vmatpush1.xpose.msra.mxu0 0.0
    %397 = vmatprep.subr.mxu0 0.0
    %398 = vmatpush1.xpose.msra.mxu0 0.0
    %399 = vmatprep.subr.mxu0 0.0
    %400 = vmatpush1.xpose.msra.mxu0 0.0
    %401 = vmatprep.subr.mxu0 0.0
    %402 = vmatpush1.xpose.msra.mxu0 0.0
    %403 = vmatprep.subr.mxu0 0.0
    %404 = vmatpush1.xpose.msra.mxu0 0.0
    %405 = vmatprep.subr.mxu0 0.0
    %406 = vmatpush1.xpose.msra.mxu0 0.0
    %407 = vmatprep.subr.mxu0 %v138
    %408 = vmatpush1.xpose.msra.mxu0 %v58
    %409 = vmatprep.subr.mxu0 0.0
    %410 = vmatpush2.xpose.msra.mxu0 0.0
    %411 = vmatprep.subr.mxu0 0.0
    %412 = vmatpush2.xpose.msra.mxu0 0.0
    %413 = vmatprep.subr.mxu0 0.0
    %414 = vmatpush2.xpose.msra.mxu0 0.0
    %415 = vmatprep.subr.mxu0 0.0
    %416 = vmatpush2.xpose.msra.mxu0 0.0
    %417 = vmatprep.subr.mxu0 0.0
    %418 = vmatpush2.xpose.msra.mxu0 0.0
    %419 = vmatprep.subr.mxu0 0.0
    %420 = vmatpush2.xpose.msra.mxu0 0.0
    %421 = vmatprep.subr.mxu0 0.0
    %422 = vmatpush2.xpose.msra.mxu0 0.0
    %423 = vmatprep.subr.mxu0 0.0
    %424 = vmatpush2.xpose.msra.mxu0 0.0
    %425 = vmatprep.subr.mxu0 0.0
    %426 = vmatpush2.xpose.msra.mxu0 0.0
    %427 = vmatprep.subr.mxu0 0.0
    %428 = vmatpush2.xpose.msra.mxu0 0.0
    %429 = vmatprep.subr.mxu0 0.0
    %430 = vmatpush2.xpose.msra.mxu0 0.0
    %431 = vmatprep.subr.mxu0 0.0
    %432 = vmatpush2.xpose.msra.mxu0 0.0
    %433 = vmatprep.subr.mxu0 0.0
    %434 = vmatpush2.xpose.msra.mxu0 0.0
    %435 = vmatprep.subr.mxu0 0.0
    %436 = vmatpush2.xpose.msra.mxu0 0.0
    %437 = vmatprep.subr.mxu0 0.0
    %438 = vmatpush2.xpose.msra.mxu0 0.0
    %439 = vmatprep.subr.mxu0 0.0
    %440 = vmatpush2.xpose.msra.mxu0 0.0
    %441 = vmatprep.mubr.f32.mxu0 %v90
    %442 = vmatmul.mubr.f32.gmra.mxu0 %v42
    %v443 = vpop.f32.mrf.mxu0
    %v444 = vadd.f32 %v374, %v443
    %v445 = vpop.f32.mrf.mxu0
    %446 = vdwg.mxu0
    %447 = vmatprep.subr.mxu0 0.0
    %448 = vmatpush1.xpose.msra.mxu0 0.0
    %449 = vmatprep.subr.mxu0 0.0
    %450 = vmatpush1.xpose.msra.mxu0 0.0
    %451 = vmatprep.subr.mxu0 0.0
    %452 = vmatpush1.xpose.msra.mxu0 0.0
    %453 = vmatprep.subr.mxu0 0.0
    %454 = vmatpush1.xpose.msra.mxu0 0.0
    %455 = vmatprep.subr.mxu0 0.0
    %456 = vmatpush1.xpose.msra.mxu0 0.0
    %457 = vmatprep.subr.mxu0 0.0
    %458 = vmatpush1.xpose.msra.mxu0 0.0
    %459 = vmatprep.subr.mxu0 0.0
    %460 = vmatpush1.xpose.msra.mxu0 0.0
    %461 = vmatprep.subr.mxu0 0.0
    %462 = vmatpush1.xpose.msra.mxu0 0.0
    %463 = vmatprep.subr.mxu0 0.0
    %464 = vmatpush1.xpose.msra.mxu0 0.0
    %465 = vmatprep.subr.mxu0 0.0
    %466 = vmatpush1.xpose.msra.mxu0 0.0
    %467 = vmatprep.subr.mxu0 0.0
    %468 = vmatpush1.xpose.msra.mxu0 0.0
    %469 = vmatprep.subr.mxu0 0.0
    %470 = vmatpush1.xpose.msra.mxu0 0.0
    %471 = vmatprep.subr.mxu0 0.0
    %472 = vmatpush1.xpose.msra.mxu0 0.0
    %473 = vmatprep.subr.mxu0 0.0
    %474 = vmatpush1.xpose.msra.mxu0 0.0
    %475 = vmatprep.subr.mxu0 0.0
    %476 = vmatpush1.xpose.msra.mxu0 0.0
    %477 = vmatprep.subr.mxu0 %v139
    %478 = vmatpush1.xpose.msra.mxu0 %v59
    %479 = vmatprep.subr.mxu0 0.0
    %480 = vmatpush2.xpose.msra.mxu0 0.0
    %481 = vmatprep.subr.mxu0 0.0
    %482 = vmatpush2.xpose.msra.mxu0 0.0
    %483 = vmatprep.subr.mxu0 0.0
    %484 = vmatpush2.xpose.msra.mxu0 0.0
    %485 = vmatprep.subr.mxu0 0.0
    %486 = vmatpush2.xpose.msra.mxu0 0.0
    %487 = vmatprep.subr.mxu0 0.0
    %488 = vmatpush2.xpose.msra.mxu0 0.0
    %489 = vmatprep.subr.mxu0 0.0
    %490 = vmatpush2.xpose.msra.mxu0 0.0
    %491 = vmatprep.subr.mxu0 0.0
    %492 = vmatpush2.xpose.msra.mxu0 0.0
    %493 = vmatprep.subr.mxu0 0.0
    %494 = vmatpush2.xpose.msra.mxu0 0.0
    %495 = vmatprep.subr.mxu0 0.0
    %496 = vmatpush2.xpose.msra.mxu0 0.0
    %497 = vmatprep.subr.mxu0 0.0
    %498 = vmatpush2.xpose.msra.mxu0 0.0
    %499 = vmatprep.subr.mxu0 0.0
    %500 = vmatpush2.xpose.msra.mxu0 0.0
    %501 = vmatprep.subr.mxu0 0.0
    %502 = vmatpush2.xpose.msra.mxu0 0.0
    %503 = vmatprep.subr.mxu0 0.0
    %504 = vmatpush2.xpose.msra.mxu0 0.0
    %505 = vmatprep.subr.mxu0 0.0
    %506 = vmatpush2.xpose.msra.mxu0 0.0
    %507 = vmatprep.subr.mxu0 0.0
    %508 = vmatpush2.xpose.msra.mxu0 0.0
    %509 = vmatprep.subr.mxu0 0.0
    %510 = vmatpush2.xpose.msra.mxu0 0.0
    %511 = vmatprep.mubr.f32.mxu0 %v91
    %512 = vmatmul.mubr.f32.gmra.mxu0 %v43
    %v513 = vpop.f32.mrf.mxu0
    %v514 = vadd.f32 %v444, %v513
    %v515 = vpop.f32.mrf.mxu0
    %516 = vdwg.mxu0
    %517 = vmatprep.subr.mxu0 0.0
    %518 = vmatpush1.xpose.msra.mxu0 0.0
    %519 = vmatprep.subr.mxu0 0.0
    %520 = vmatpush1.xpose.msra.mxu0 0.0
    %521 = vmatprep.subr.mxu0 0.0
    %522 = vmatpush1.xpose.msra.mxu0 0.0
    %523 = vmatprep.subr.mxu0 0.0
    %524 = vmatpush1.xpose.msra.mxu0 0.0
    %525 = vmatprep.subr.mxu0 0.0
    %526 = vmatpush1.xpose.msra.mxu0 0.0
    %527 = vmatprep.subr.mxu0 0.0
    %528 = vmatpush1.xpose.msra.mxu0 0.0
    %529 = vmatprep.subr.mxu0 0.0
    %530 = vmatpush1.xpose.msra.mxu0 0.0
    %531 = vmatprep.subr.mxu0 0.0
    %532 = vmatpush1.xpose.msra.mxu0 0.0
    %533 = vmatprep.subr.mxu0 0.0
    %534 = vmatpush1.xpose.msra.mxu0 0.0
    %535 = vmatprep.subr.mxu0 0.0
    %536 = vmatpush1.xpose.msra.mxu0 0.0
    %537 = vmatprep.subr.mxu0 0.0
    %538 = vmatpush1.xpose.msra.mxu0 0.0
    %539 = vmatprep.subr.mxu0 0.0
    %540 = vmatpush1.xpose.msra.mxu0 0.0
    %541 = vmatprep.subr.mxu0 0.0
    %542 = vmatpush1.xpose.msra.mxu0 0.0
    %543 = vmatprep.subr.mxu0 0.0
    %544 = vmatpush1.xpose.msra.mxu0 0.0
    %545 = vmatprep.subr.mxu0 0.0
    %546 = vmatpush1.xpose.msra.mxu0 0.0
    %547 = vmatprep.subr.mxu0 %v140
    %548 = vmatpush1.xpose.msra.mxu0 %v60
    %549 = vmatprep.subr.mxu0 0.0
    %550 = vmatpush2.xpose.msra.mxu0 0.0
    %551 = vmatprep.subr.mxu0 0.0
    %552 = vmatpush2.xpose.msra.mxu0 0.0
    %553 = vmatprep.subr.mxu0 0.0
    %554 = vmatpush2.xpose.msra.mxu0 0.0
    %555 = vmatprep.subr.mxu0 0.0
    %556 = vmatpush2.xpose.msra.mxu0 0.0
    %557 = vmatprep.subr.mxu0 0.0
    %558 = vmatpush2.xpose.msra.mxu0 0.0
    %559 = vmatprep.subr.mxu0 0.0
    %560 = vmatpush2.xpose.msra.mxu0 0.0
    %561 = vmatprep.subr.mxu0 0.0
    %562 = vmatpush2.xpose.msra.mxu0 0.0
    %563 = vmatprep.subr.mxu0 0.0
    %564 = vmatpush2.xpose.msra.mxu0 0.0
    %565 = vmatprep.subr.mxu0 0.0
    %566 = vmatpush2.xpose.msra.mxu0 0.0
    %567 = vmatprep.subr.mxu0 0.0
    %568 = vmatpush2.xpose.msra.mxu0 0.0
    %569 = vmatprep.subr.mxu0 0.0
    %570 = vmatpush2.xpose.msra.mxu0 0.0
    %571 = vmatprep.subr.mxu0 0.0
    %572 = vmatpush2.xpose.msra.mxu0 0.0
    %573 = vmatprep.subr.mxu0 0.0
    %574 = vmatpush2.xpose.msra.mxu0 0.0
    %575 = vmatprep.subr.mxu0 0.0
    %576 = vmatpush2.xpose.msra.mxu0 0.0
    %577 = vmatprep.subr.mxu0 0.0
    %578 = vmatpush2.xpose.msra.mxu0 0.0
    %579 = vmatprep.subr.mxu0 0.0
    %580 = vmatpush2.xpose.msra.mxu0 0.0
    %581 = vmatprep.mubr.f32.mxu0 %v92
    %582 = vmatmul.mubr.f32.gmra.mxu0 %v44
    %v583 = vpop.f32.mrf.mxu0
    %v584 = vadd.f32 %v514, %v583
    %v585 = vpop.f32.mrf.mxu0
    %586 = vdwg.mxu0
    %587 = vmatprep.subr.mxu0 0.0
    %588 = vmatpush1.xpose.msra.mxu0 0.0
    %589 = vmatprep.subr.mxu0 0.0
    %590 = vmatpush1.xpose.msra.mxu0 0.0
    %591 = vmatprep.subr.mxu0 0.0
    %592 = vmatpush1.xpose.msra.mxu0 0.0
    %593 = vmatprep.subr.mxu0 0.0
    %594 = vmatpush1.xpose.msra.mxu0 0.0
    %595 = vmatprep.subr.mxu0 0.0
    %596 = vmatpush1.xpose.msra.mxu0 0.0
    %597 = vmatprep.subr.mxu0 0.0
    %598 = vmatpush1.xpose.msra.mxu0 0.0
    %599 = vmatprep.subr.mxu0 0.0
    %600 = vmatpush1.xpose.msra.mxu0 0.0
    %601 = vmatprep.subr.mxu0 0.0
    %602 = vmatpush1.xpose.msra.mxu0 0.0
    %603 = vmatprep.subr.mxu0 0.0
    %604 = vmatpush1.xpose.msra.mxu0 0.0
    %605 = vmatprep.subr.mxu0 0.0
    %606 = vmatpush1.xpose.msra.mxu0 0.0
    %607 = vmatprep.subr.mxu0 0.0
    %608 = vmatpush1.xpose.msra.mxu0 0.0
    %609 = vmatprep.subr.mxu0 0.0
    %610 = vmatpush1.xpose.msra.mxu0 0.0
    %611 = vmatprep.subr.mxu0 0.0
    %612 = vmatpush1.xpose.msra.mxu0 0.0
    %613 = vmatprep.subr.mxu0 0.0
    %614 = vmatpush1.xpose.msra.mxu0 0.0
    %615 = vmatprep.subr.mxu0 0.0
    %616 = vmatpush1.xpose.msra.mxu0 0.0
    %617 = vmatprep.subr.mxu0 %v141
    %618 = vmatpush1.xpose.msra.mxu0 %v61
    %619 = vmatprep.subr.mxu0 0.0
    %620 = vmatpush2.xpose.msra.mxu0 0.0
    %621 = vmatprep.subr.mxu0 0.0
    %622 = vmatpush2.xpose.msra.mxu0 0.0
    %623 = vmatprep.subr.mxu0 0.0
    %624 = vmatpush2.xpose.msra.mxu0 0.0
    %625 = vmatprep.subr.mxu0 0.0
    %626 = vmatpush2.xpose.msra.mxu0 0.0
    %627 = vmatprep.subr.mxu0 0.0
    %628 = vmatpush2.xpose.msra.mxu0 0.0
    %629 = vmatprep.subr.mxu0 0.0
    %630 = vmatpush2.xpose.msra.mxu0 0.0
    %631 = vmatprep.subr.mxu0 0.0
    %632 = vmatpush2.xpose.msra.mxu0 0.0
    %633 = vmatprep.subr.mxu0 0.0
    %634 = vmatpush2.xpose.msra.mxu0 0.0
    %635 = vmatprep.subr.mxu0 0.0
    %636 = vmatpush2.xpose.msra.mxu0 0.0
    %637 = vmatprep.subr.mxu0 0.0
    %638 = vmatpush2.xpose.msra.mxu0 0.0
    %639 = vmatprep.subr.mxu0 0.0
    %640 = vmatpush2.xpose.msra.mxu0 0.0
    %641 = vmatprep.subr.mxu0 0.0
    %642 = vmatpush2.xpose.msra.mxu0 0.0
    %643 = vmatprep.subr.mxu0 0.0
    %644 = vmatpush2.xpose.msra.mxu0 0.0
    %645 = vmatprep.subr.mxu0 0.0
    %646 = vmatpush2.xpose.msra.mxu0 0.0
    %647 = vmatprep.subr.mxu0 0.0
    %648 = vmatpush2.xpose.msra.mxu0 0.0
    %649 = vmatprep.subr.mxu0 0.0
    %650 = vmatpush2.xpose.msra.mxu0 0.0
    %651 = vmatprep.mubr.f32.mxu0 %v93
    %652 = vmatmul.mubr.f32.gmra.mxu0 %v45
    %v653 = vpop.f32.mrf.mxu0
    %v654 = vadd.f32 %v584, %v653
    %v655 = vpop.f32.mrf.mxu0
    %656 = vdwg.mxu0
    %657 = vmatprep.subr.mxu0 0.0
    %658 = vmatpush1.xpose.msra.mxu0 0.0
    %659 = vmatprep.subr.mxu0 0.0
    %660 = vmatpush1.xpose.msra.mxu0 0.0
    %661 = vmatprep.subr.mxu0 0.0
    %662 = vmatpush1.xpose.msra.mxu0 0.0
    %663 = vmatprep.subr.mxu0 0.0
    %664 = vmatpush1.xpose.msra.mxu0 0.0
    %665 = vmatprep.subr.mxu0 0.0
    %666 = vmatpush1.xpose.msra.mxu0 0.0
    %667 = vmatprep.subr.mxu0 0.0
    %668 = vmatpush1.xpose.msra.mxu0 0.0
    %669 = vmatprep.subr.mxu0 0.0
    %670 = vmatpush1.xpose.msra.mxu0 0.0
    %671 = vmatprep.subr.mxu0 0.0
    %672 = vmatpush1.xpose.msra.mxu0 0.0
    %673 = vmatprep.subr.mxu0 0.0
    %674 = vmatpush1.xpose.msra.mxu0 0.0
    %675 = vmatprep.subr.mxu0 0.0
    %676 = vmatpush1.xpose.msra.mxu0 0.0
    %677 = vmatprep.subr.mxu0 0.0
    %678 = vmatpush1.xpose.msra.mxu0 0.0
    %679 = vmatprep.subr.mxu0 0.0
    %680 = vmatpush1.xpose.msra.mxu0 0.0
    %681 = vmatprep.subr.mxu0 0.0
    %682 = vmatpush1.xpose.msra.mxu0 0.0
    %683 = vmatprep.subr.mxu0 0.0
    %684 = vmatpush1.xpose.msra.mxu0 0.0
    %685 = vmatprep.subr.mxu0 0.0
    %686 = vmatpush1.xpose.msra.mxu0 0.0
    %687 = vmatprep.subr.mxu0 %v142
    %688 = vmatpush1.xpose.msra.mxu0 %v62
    %689 = vmatprep.subr.mxu0 0.0
    %690 = vmatpush2.xpose.msra.mxu0 0.0
    %691 = vmatprep.subr.mxu0 0.0
    %692 = vmatpush2.xpose.msra.mxu0 0.0
    %693 = vmatprep.subr.mxu0 0.0
    %694 = vmatpush2.xpose.msra.mxu0 0.0
    %695 = vmatprep.subr.mxu0 0.0
    %696 = vmatpush2.xpose.msra.mxu0 0.0
    %697 = vmatprep.subr.mxu0 0.0
    %698 = vmatpush2.xpose.msra.mxu0 0.0
    %699 = vmatprep.subr.mxu0 0.0
    %700 = vmatpush2.xpose.msra.mxu0 0.0
    %701 = vmatprep.subr.mxu0 0.0
    %702 = vmatpush2.xpose.msra.mxu0 0.0
    %703 = vmatprep.subr.mxu0 0.0
    %704 = vmatpush2.xpose.msra.mxu0 0.0
    %705 = vmatprep.subr.mxu0 0.0
    %706 = vmatpush2.xpose.msra.mxu0 0.0
    %707 = vmatprep.subr.mxu0 0.0
    %708 = vmatpush2.xpose.msra.mxu0 0.0
    %709 = vmatprep.subr.mxu0 0.0
    %710 = vmatpush2.xpose.msra.mxu0 0.0
    %711 = vmatprep.subr.mxu0 0.0
    %712 = vmatpush2.xpose.msra.mxu0 0.0
    %713 = vmatprep.subr.mxu0 0.0
    %714 = vmatpush2.xpose.msra.mxu0 0.0
    %715 = vmatprep.subr.mxu0 0.0
    %716 = vmatpush2.xpose.msra.mxu0 0.0
    %717 = vmatprep.subr.mxu0 0.0
    %718 = vmatpush2.xpose.msra.mxu0 0.0
    %719 = vmatprep.subr.mxu0 0.0
    %720 = vmatpush2.xpose.msra.mxu0 0.0
    %721 = vmatprep.mubr.f32.mxu0 %v94
    %722 = vmatmul.mubr.f32.gmra.mxu0 %v46
    %v723 = vpop.f32.mrf.mxu0
    %v724 = vadd.f32 %v654, %v723
    %v725 = vpop.f32.mrf.mxu0
    %726 = vdwg.mxu0
    %727 = vmatprep.subr.mxu0 0.0
    %728 = vmatpush1.xpose.msra.mxu0 0.0
    %729 = vmatprep.subr.mxu0 0.0
    %730 = vmatpush1.xpose.msra.mxu0 0.0
    %731 = vmatprep.subr.mxu0 0.0
    %732 = vmatpush1.xpose.msra.mxu0 0.0
    %733 = vmatprep.subr.mxu0 0.0
    %734 = vmatpush1.xpose.msra.mxu0 0.0
    %735 = vmatprep.subr.mxu0 0.0
    %736 = vmatpush1.xpose.msra.mxu0 0.0
    %737 = vmatprep.subr.mxu0 0.0
    %738 = vmatpush1.xpose.msra.mxu0 0.0
    %739 = vmatprep.subr.mxu0 0.0
    %740 = vmatpush1.xpose.msra.mxu0 0.0
    %741 = vmatprep.subr.mxu0 0.0
    %742 = vmatpush1.xpose.msra.mxu0 0.0
    %743 = vmatprep.subr.mxu0 0.0
    %744 = vmatpush1.xpose.msra.mxu0 0.0
    %745 = vmatprep.subr.mxu0 0.0
    %746 = vmatpush1.xpose.msra.mxu0 0.0
    %747 = vmatprep.subr.mxu0 0.0
    %748 = vmatpush1.xpose.msra.mxu0 0.0
    %749 = vmatprep.subr.mxu0 0.0
    %750 = vmatpush1.xpose.msra.mxu0 0.0
    %751 = vmatprep.subr.mxu0 0.0
    %752 = vmatpush1.xpose.msra.mxu0 0.0
    %753 = vmatprep.subr.mxu0 0.0
    %754 = vmatpush1.xpose.msra.mxu0 0.0
    %755 = vmatprep.subr.mxu0 0.0
    %756 = vmatpush1.xpose.msra.mxu0 0.0
    %757 = vmatprep.subr.mxu0 %v143
    %758 = vmatpush1.xpose.msra.mxu0 %v63
    %759 = vmatprep.subr.mxu0 0.0
    %760 = vmatpush2.xpose.msra.mxu0 0.0
    %761 = vmatprep.subr.mxu0 0.0
    %762 = vmatpush2.xpose.msra.mxu0 0.0
    %763 = vmatprep.subr.mxu0 0.0
    %764 = vmatpush2.xpose.msra.mxu0 0.0
    %765 = vmatprep.subr.mxu0 0.0
    %766 = vmatpush2.xpose.msra.mxu0 0.0
    %767 = vmatprep.subr.mxu0 0.0
    %768 = vmatpush2.xpose.msra.mxu0 0.0
    %769 = vmatprep.subr.mxu0 0.0
    %770 = vmatpush2.xpose.msra.mxu0 0.0
    %771 = vmatprep.subr.mxu0 0.0
    %772 = vmatpush2.xpose.msra.mxu0 0.0
    %773 = vmatprep.subr.mxu0 0.0
    %774 = vmatpush2.xpose.msra.mxu0 0.0
    %775 = vmatprep.subr.mxu0 0.0
    %776 = vmatpush2.xpose.msra.mxu0 0.0
    %777 = vmatprep.subr.mxu0 0.0
    %778 = vmatpush2.xpose.msra.mxu0 0.0
    %779 = vmatprep.subr.mxu0 0.0
    %780 = vmatpush2.xpose.msra.mxu0 0.0
    %781 = vmatprep.subr.mxu0 0.0
    %782 = vmatpush2.xpose.msra.mxu0 0.0
    %783 = vmatprep.subr.mxu0 0.0
    %784 = vmatpush2.xpose.msra.mxu0 0.0
    %785 = vmatprep.subr.mxu0 0.0
    %786 = vmatpush2.xpose.msra.mxu0 0.0
    %787 = vmatprep.subr.mxu0 0.0
    %788 = vmatpush2.xpose.msra.mxu0 0.0
    %789 = vmatprep.subr.mxu0 0.0
    %790 = vmatpush2.xpose.msra.mxu0 0.0
    %791 = vmatprep.mubr.f32.mxu0 %v95
    %792 = vmatmul.mubr.f32.gmra.mxu0 %v47
    %v793 = vpop.f32.mrf.mxu0
    %v794 = vadd.f32 %v724, %v793
    %v795 = vpop.f32.mrf.mxu0
    %796 = vdwg.mxu0
    %797 = vmatprep.subr.mxu0 0.0
    %798 = vmatpush1.xpose.msra.mxu0 0.0
    %799 = vmatprep.subr.mxu0 0.0
    %800 = vmatpush1.xpose.msra.mxu0 0.0
    %801 = vmatprep.subr.mxu0 0.0
    %802 = vmatpush1.xpose.msra.mxu0 0.0
    %803 = vmatprep.subr.mxu0 0.0
    %804 = vmatpush1.xpose.msra.mxu0 0.0
    %805 = vmatprep.subr.mxu0 0.0
    %806 = vmatpush1.xpose.msra.mxu0 0.0
    %807 = vmatprep.subr.mxu0 0.0
    %808 = vmatpush1.xpose.msra.mxu0 0.0
    %809 = vmatprep.subr.mxu0 0.0
    %810 = vmatpush1.xpose.msra.mxu0 0.0
    %811 = vmatprep.subr.mxu0 0.0
    %812 = vmatpush1.xpose.msra.mxu0 0.0
    %813 = vmatprep.subr.mxu0 0.0
    %814 = vmatpush1.xpose.msra.mxu0 0.0
    %815 = vmatprep.subr.mxu0 0.0
    %816 = vmatpush1.xpose.msra.mxu0 0.0
    %817 = vmatprep.subr.mxu0 0.0
    %818 = vmatpush1.xpose.msra.mxu0 0.0
    %819 = vmatprep.subr.mxu0 0.0
    %820 = vmatpush1.xpose.msra.mxu0 0.0
    %821 = vmatprep.subr.mxu0 0.0
    %822 = vmatpush1.xpose.msra.mxu0 0.0
    %823 = vmatprep.subr.mxu0 0.0
    %824 = vmatpush1.xpose.msra.mxu0 0.0
    %825 = vmatprep.subr.mxu0 0.0
    %826 = vmatpush1.xpose.msra.mxu0 0.0
    %827 = vmatprep.subr.mxu0 %v144
    %828 = vmatpush1.xpose.msra.mxu0 %v64
    %829 = vmatprep.subr.mxu0 0.0
    %830 = vmatpush2.xpose.msra.mxu0 0.0
    %831 = vmatprep.subr.mxu0 0.0
    %832 = vmatpush2.xpose.msra.mxu0 0.0
    %833 = vmatprep.subr.mxu0 0.0
    %834 = vmatpush2.xpose.msra.mxu0 0.0
    %835 = vmatprep.subr.mxu0 0.0
    %836 = vmatpush2.xpose.msra.mxu0 0.0
    %837 = vmatprep.subr.mxu0 0.0
    %838 = vmatpush2.xpose.msra.mxu0 0.0
    %839 = vmatprep.subr.mxu0 0.0
    %840 = vmatpush2.xpose.msra.mxu0 0.0
    %841 = vmatprep.subr.mxu0 0.0
    %842 = vmatpush2.xpose.msra.mxu0 0.0
    %843 = vmatprep.subr.mxu0 0.0
    %844 = vmatpush2.xpose.msra.mxu0 0.0
    %845 = vmatprep.subr.mxu0 0.0
    %846 = vmatpush2.xpose.msra.mxu0 0.0
    %847 = vmatprep.subr.mxu0 0.0
    %848 = vmatpush2.xpose.msra.mxu0 0.0
    %849 = vmatprep.subr.mxu0 0.0
    %850 = vmatpush2.xpose.msra.mxu0 0.0
    %851 = vmatprep.subr.mxu0 0.0
    %852 = vmatpush2.xpose.msra.mxu0 0.0
    %853 = vmatprep.subr.mxu0 0.0
    %854 = vmatpush2.xpose.msra.mxu0 0.0
    %855 = vmatprep.subr.mxu0 0.0
    %856 = vmatpush2.xpose.msra.mxu0 0.0
    %857 = vmatprep.subr.mxu0 0.0
    %858 = vmatpush2.xpose.msra.mxu0 0.0
    %859 = vmatprep.subr.mxu0 0.0
    %860 = vmatpush2.xpose.msra.mxu0 0.0
    %861 = vmatprep.mubr.f32.mxu0 %v96
    %862 = vmatmul.mubr.f32.gmra.mxu0 %v48
    %v863 = vpop.f32.mrf.mxu0
    %v864 = vadd.f32 %v794, %v863
    %v865 = vpop.f32.mrf.mxu0
    %866 = vdwg.mxu0
    %867 = vmatprep.subr.mxu0 0.0
    %868 = vmatpush1.xpose.msra.mxu0 0.0
    %869 = vmatprep.subr.mxu0 0.0
    %870 = vmatpush1.xpose.msra.mxu0 0.0
    %871 = vmatprep.subr.mxu0 0.0
    %872 = vmatpush1.xpose.msra.mxu0 0.0
    %873 = vmatprep.subr.mxu0 0.0
    %874 = vmatpush1.xpose.msra.mxu0 0.0
    %875 = vmatprep.subr.mxu0 0.0
    %876 = vmatpush1.xpose.msra.mxu0 0.0
    %877 = vmatprep.subr.mxu0 0.0
    %878 = vmatpush1.xpose.msra.mxu0 0.0
    %879 = vmatprep.subr.mxu0 0.0
    %880 = vmatpush1.xpose.msra.mxu0 0.0
    %881 = vmatprep.subr.mxu0 0.0
    %882 = vmatpush1.xpose.msra.mxu0 0.0
    %883 = vmatprep.subr.mxu0 0.0
    %884 = vmatpush1.xpose.msra.mxu0 0.0
    %885 = vmatprep.subr.mxu0 0.0
    %886 = vmatpush1.xpose.msra.mxu0 0.0
    %887 = vmatprep.subr.mxu0 0.0
    %888 = vmatpush1.xpose.msra.mxu0 0.0
    %889 = vmatprep.subr.mxu0 0.0
    %890 = vmatpush1.xpose.msra.mxu0 0.0
    %891 = vmatprep.subr.mxu0 0.0
    %892 = vmatpush1.xpose.msra.mxu0 0.0
    %893 = vmatprep.subr.mxu0 0.0
    %894 = vmatpush1.xpose.msra.mxu0 0.0
    %895 = vmatprep.subr.mxu0 0.0
    %896 = vmatpush1.xpose.msra.mxu0 0.0
    %897 = vmatprep.subr.mxu0 %v145
    %898 = vmatpush1.xpose.msra.mxu0 %v65
    %899 = vmatprep.subr.mxu0 0.0
    %900 = vmatpush2.xpose.msra.mxu0 0.0
    %901 = vmatprep.subr.mxu0 0.0
    %902 = vmatpush2.xpose.msra.mxu0 0.0
    %903 = vmatprep.subr.mxu0 0.0
    %904 = vmatpush2.xpose.msra.mxu0 0.0
    %905 = vmatprep.subr.mxu0 0.0
    %906 = vmatpush2.xpose.msra.mxu0 0.0
    %907 = vmatprep.subr.mxu0 0.0
    %908 = vmatpush2.xpose.msra.mxu0 0.0
    %909 = vmatprep.subr.mxu0 0.0
    %910 = vmatpush2.xpose.msra.mxu0 0.0
    %911 = vmatprep.subr.mxu0 0.0
    %912 = vmatpush2.xpose.msra.mxu0 0.0
    %913 = vmatprep.subr.mxu0 0.0
    %914 = vmatpush2.xpose.msra.mxu0 0.0
    %915 = vmatprep.subr.mxu0 0.0
    %916 = vmatpush2.xpose.msra.mxu0 0.0
    %917 = vmatprep.subr.mxu0 0.0
    %918 = vmatpush2.xpose.msra.mxu0 0.0
    %919 = vmatprep.subr.mxu0 0.0
    %920 = vmatpush2.xpose.msra.mxu0 0.0
    %921 = vmatprep.subr.mxu0 0.0
    %922 = vmatpush2.xpose.msra.mxu0 0.0
    %923 = vmatprep.subr.mxu0 0.0
    %924 = vmatpush2.xpose.msra.mxu0 0.0
    %925 = vmatprep.subr.mxu0 0.0
    %926 = vmatpush2.xpose.msra.mxu0 0.0
    %927 = vmatprep.subr.mxu0 0.0
    %928 = vmatpush2.xpose.msra.mxu0 0.0
    %929 = vmatprep.subr.mxu0 0.0
    %930 = vmatpush2.xpose.msra.mxu0 0.0
    %931 = vmatprep.mubr.f32.mxu0 %v97
    %932 = vmatmul.mubr.f32.gmra.mxu0 %v49
    %v933 = vpop.f32.mrf.mxu0
    %v934 = vadd.f32 %v864, %v933
    %v935 = vpop.f32.mrf.mxu0
    %936 = vdwg.mxu0
    %937 = vmatprep.subr.mxu0 0.0
    %938 = vmatpush1.xpose.msra.mxu0 0.0
    %939 = vmatprep.subr.mxu0 0.0
    %940 = vmatpush1.xpose.msra.mxu0 0.0
    %941 = vmatprep.subr.mxu0 0.0
    %942 = vmatpush1.xpose.msra.mxu0 0.0
    %943 = vmatprep.subr.mxu0 0.0
    %944 = vmatpush1.xpose.msra.mxu0 0.0
    %945 = vmatprep.subr.mxu0 0.0
    %946 = vmatpush1.xpose.msra.mxu0 0.0
    %947 = vmatprep.subr.mxu0 0.0
    %948 = vmatpush1.xpose.msra.mxu0 0.0
    %949 = vmatprep.subr.mxu0 0.0
    %950 = vmatpush1.xpose.msra.mxu0 0.0
    %951 = vmatprep.subr.mxu0 0.0
    %952 = vmatpush1.xpose.msra.mxu0 0.0
    %953 = vmatprep.subr.mxu0 0.0
    %954 = vmatpush1.xpose.msra.mxu0 0.0
    %955 = vmatprep.subr.mxu0 0.0
    %956 = vmatpush1.xpose.msra.mxu0 0.0
    %957 = vmatprep.subr.mxu0 0.0
    %958 = vmatpush1.xpose.msra.mxu0 0.0
    %959 = vmatprep.subr.mxu0 0.0
    %960 = vmatpush1.xpose.msra.mxu0 0.0
    %961 = vmatprep.subr.mxu0 0.0
    %962 = vmatpush1.xpose.msra.mxu0 0.0
    %963 = vmatprep.subr.mxu0 0.0
    %964 = vmatpush1.xpose.msra.mxu0 0.0
    %965 = vmatprep.subr.mxu0 0.0
    %966 = vmatpush1.xpose.msra.mxu0 0.0
    %967 = vmatprep.subr.mxu0 %v146
    %968 = vmatpush1.xpose.msra.mxu0 %v66
    %969 = vmatprep.subr.mxu0 0.0
    %970 = vmatpush2.xpose.msra.mxu0 0.0
    %971 = vmatprep.subr.mxu0 0.0
    %972 = vmatpush2.xpose.msra.mxu0 0.0
    %973 = vmatprep.subr.mxu0 0.0
    %974 = vmatpush2.xpose.msra.mxu0 0.0
    %975 = vmatprep.subr.mxu0 0.0
    %976 = vmatpush2.xpose.msra.mxu0 0.0
    %977 = vmatprep.subr.mxu0 0.0
    %978 = vmatpush2.xpose.msra.mxu0 0.0
    %979 = vmatprep.subr.mxu0 0.0
    %980 = vmatpush2.xpose.msra.mxu0 0.0
    %981 = vmatprep.subr.mxu0 0.0
    %982 = vmatpush2.xpose.msra.mxu0 0.0
    %983 = vmatprep.subr.mxu0 0.0
    %984 = vmatpush2.xpose.msra.mxu0 0.0
    %985 = vmatprep.subr.mxu0 0.0
    %986 = vmatpush2.xpose.msra.mxu0 0.0
    %987 = vmatprep.subr.mxu0 0.0
    %988 = vmatpush2.xpose.msra.mxu0 0.0
    %989 = vmatprep.subr.mxu0 0.0
    %990 = vmatpush2.xpose.msra.mxu0 0.0
    %991 = vmatprep.subr.mxu0 0.0
    %992 = vmatpush2.xpose.msra.mxu0 0.0
    %993 = vmatprep.subr.mxu0 0.0
    %994 = vmatpush2.xpose.msra.mxu0 0.0
    %995 = vmatprep.subr.mxu0 0.0
    %996 = vmatpush2.xpose.msra.mxu0 0.0
    %997 = vmatprep.subr.mxu0 0.0
    %998 = vmatpush2.xpose.msra.mxu0 0.0
    %999 = vmatprep.subr.mxu0 0.0
    %1000 = vmatpush2.xpose.msra.mxu0 0.0
    %1001 = vmatprep.mubr.f32.mxu0 %v98
    %1002 = vmatmul.mubr.f32.gmra.mxu0 %v50
    %v1003 = vpop.f32.mrf.mxu0
    %v1004 = vadd.f32 %v934, %v1003
    %v1005 = vpop.f32.mrf.mxu0
    %1006 = vdwg.mxu0
    %1007 = vmatprep.subr.mxu0 0.0
    %1008 = vmatpush1.xpose.msra.mxu0 0.0
    %1009 = vmatprep.subr.mxu0 0.0
    %1010 = vmatpush1.xpose.msra.mxu0 0.0
    %1011 = vmatprep.subr.mxu0 0.0
    %1012 = vmatpush1.xpose.msra.mxu0 0.0
    %1013 = vmatprep.subr.mxu0 0.0
    %1014 = vmatpush1.xpose.msra.mxu0 0.0
    %1015 = vmatprep.subr.mxu0 0.0
    %1016 = vmatpush1.xpose.msra.mxu0 0.0
    %1017 = vmatprep.subr.mxu0 0.0
    %1018 = vmatpush1.xpose.msra.mxu0 0.0
    %1019 = vmatprep.subr.mxu0 0.0
    %1020 = vmatpush1.xpose.msra.mxu0 0.0
    %1021 = vmatprep.subr.mxu0 0.0
    %1022 = vmatpush1.xpose.msra.mxu0 0.0
    %1023 = vmatprep.subr.mxu0 0.0
    %1024 = vmatpush1.xpose.msra.mxu0 0.0
    %1025 = vmatprep.subr.mxu0 0.0
    %1026 = vmatpush1.xpose.msra.mxu0 0.0
    %1027 = vmatprep.subr.mxu0 0.0
    %1028 = vmatpush1.xpose.msra.mxu0 0.0
    %1029 = vmatprep.subr.mxu0 0.0
    %1030 = vmatpush1.xpose.msra.mxu0 0.0
    %1031 = vmatprep.subr.mxu0 0.0
    %1032 = vmatpush1.xpose.msra.mxu0 0.0
    %1033 = vmatprep.subr.mxu0 0.0
    %1034 = vmatpush1.xpose.msra.mxu0 0.0
    %1035 = vmatprep.subr.mxu0 0.0
    %1036 = vmatpush1.xpose.msra.mxu0 0.0
    %1037 = vmatprep.subr.mxu0 %v147
    %1038 = vmatpush1.xpose.msra.mxu0 %v67
    %1039 = vmatprep.subr.mxu0 0.0
    %1040 = vmatpush2.xpose.msra.mxu0 0.0
    %1041 = vmatprep.subr.mxu0 0.0
    %1042 = vmatpush2.xpose.msra.mxu0 0.0
    %1043 = vmatprep.subr.mxu0 0.0
    %1044 = vmatpush2.xpose.msra.mxu0 0.0
    %1045 = vmatprep.subr.mxu0 0.0
    %1046 = vmatpush2.xpose.msra.mxu0 0.0
    %1047 = vmatprep.subr.mxu0 0.0
    %1048 = vmatpush2.xpose.msra.mxu0 0.0
    %1049 = vmatprep.subr.mxu0 0.0
    %1050 = vmatpush2.xpose.msra.mxu0 0.0
    %1051 = vmatprep.subr.mxu0 0.0
    %1052 = vmatpush2.xpose.msra.mxu0 0.0
    %1053 = vmatprep.subr.mxu0 0.0
    %1054 = vmatpush2.xpose.msra.mxu0 0.0
    %1055 = vmatprep.subr.mxu0 0.0
    %1056 = vmatpush2.xpose.msra.mxu0 0.0
    %1057 = vmatprep.subr.mxu0 0.0
    %1058 = vmatpush2.xpose.msra.mxu0 0.0
    %1059 = vmatprep.subr.mxu0 0.0
    %1060 = vmatpush2.xpose.msra.mxu0 0.0
    %1061 = vmatprep.subr.mxu0 0.0
    %1062 = vmatpush2.xpose.msra.mxu0 0.0
    %1063 = vmatprep.subr.mxu0 0.0
    %1064 = vmatpush2.xpose.msra.mxu0 0.0
    %1065 = vmatprep.subr.mxu0 0.0
    %1066 = vmatpush2.xpose.msra.mxu0 0.0
    %1067 = vmatprep.subr.mxu0 0.0
    %1068 = vmatpush2.xpose.msra.mxu0 0.0
    %1069 = vmatprep.subr.mxu0 0.0
    %1070 = vmatpush2.xpose.msra.mxu0 0.0
    %1071 = vmatprep.mubr.f32.mxu0 %v99
    %1072 = vmatmul.mubr.f32.gmra.mxu0 %v51
    %v1073 = vpop.f32.mrf.mxu0
    %v1074 = vadd.f32 %v1004, %v1073
    %v1075 = vpop.f32.mrf.mxu0
    %1076 = vdwg.mxu0
    %1077 = vmatprep.subr.mxu0 0.0
    %1078 = vmatpush1.xpose.msra.mxu0 0.0
    %1079 = vmatprep.subr.mxu0 0.0
    %1080 = vmatpush1.xpose.msra.mxu0 0.0
    %1081 = vmatprep.subr.mxu0 0.0
    %1082 = vmatpush1.xpose.msra.mxu0 0.0
    %1083 = vmatprep.subr.mxu0 0.0
    %1084 = vmatpush1.xpose.msra.mxu0 0.0
    %1085 = vmatprep.subr.mxu0 0.0
    %1086 = vmatpush1.xpose.msra.mxu0 0.0
    %1087 = vmatprep.subr.mxu0 0.0
    %1088 = vmatpush1.xpose.msra.mxu0 0.0
    %1089 = vmatprep.subr.mxu0 0.0
    %1090 = vmatpush1.xpose.msra.mxu0 0.0
    %1091 = vmatprep.subr.mxu0 0.0
    %1092 = vmatpush1.xpose.msra.mxu0 0.0
    %1093 = vmatprep.subr.mxu0 0.0
    %1094 = vmatpush1.xpose.msra.mxu0 0.0
    %1095 = vmatprep.subr.mxu0 0.0
    %1096 = vmatpush1.xpose.msra.mxu0 0.0
    %1097 = vmatprep.subr.mxu0 0.0
    %1098 = vmatpush1.xpose.msra.mxu0 0.0
    %1099 = vmatprep.subr.mxu0 0.0
    %1100 = vmatpush1.xpose.msra.mxu0 0.0
    %1101 = vmatprep.subr.mxu0 0.0
    %1102 = vmatpush1.xpose.msra.mxu0 0.0
    %1103 = vmatprep.subr.mxu0 0.0
    %1104 = vmatpush1.xpose.msra.mxu0 0.0
    %1105 = vmatprep.subr.mxu0 0.0
    %1106 = vmatpush1.xpose.msra.mxu0 0.0
    %1107 = vmatprep.subr.mxu0 %v148
    %1108 = vmatpush1.xpose.msra.mxu0 %v68
    %1109 = vmatprep.subr.mxu0 0.0
    %1110 = vmatpush2.xpose.msra.mxu0 0.0
    %1111 = vmatprep.subr.mxu0 0.0
    %1112 = vmatpush2.xpose.msra.mxu0 0.0
    %1113 = vmatprep.subr.mxu0 0.0
    %1114 = vmatpush2.xpose.msra.mxu0 0.0
    %1115 = vmatprep.subr.mxu0 0.0
    %1116 = vmatpush2.xpose.msra.mxu0 0.0
    %1117 = vmatprep.subr.mxu0 0.0
    %1118 = vmatpush2.xpose.msra.mxu0 0.0
    %1119 = vmatprep.subr.mxu0 0.0
    %1120 = vmatpush2.xpose.msra.mxu0 0.0
    %1121 = vmatprep.subr.mxu0 0.0
    %1122 = vmatpush2.xpose.msra.mxu0 0.0
    %1123 = vmatprep.subr.mxu0 0.0
    %1124 = vmatpush2.xpose.msra.mxu0 0.0
    %1125 = vmatprep.subr.mxu0 0.0
    %1126 = vmatpush2.xpose.msra.mxu0 0.0
    %1127 = vmatprep.subr.mxu0 0.0
    %1128 = vmatpush2.xpose.msra.mxu0 0.0
    %1129 = vmatprep.subr.mxu0 0.0
    %1130 = vmatpush2.xpose.msra.mxu0 0.0
    %1131 = vmatprep.subr.mxu0 0.0
    %1132 = vmatpush2.xpose.msra.mxu0 0.0
    %1133 = vmatprep.subr.mxu0 0.0
    %1134 = vmatpush2.xpose.msra.mxu0 0.0
    %1135 = vmatprep.subr.mxu0 0.0
    %1136 = vmatpush2.xpose.msra.mxu0 0.0
    %1137 = vmatprep.subr.mxu0 0.0
    %1138 = vmatpush2.xpose.msra.mxu0 0.0
    %1139 = vmatprep.subr.mxu0 0.0
    %1140 = vmatpush2.xpose.msra.mxu0 0.0
    %1141 = vmatprep.mubr.f32.mxu0 %v100
    %1142 = vmatmul.mubr.f32.gmra.mxu0 %v52
    %v1143 = vpop.f32.mrf.mxu0
    %v1144 = vadd.f32 %v1074, %v1143
    %v1145 = vpop.f32.mrf.mxu0
    %1146 = vdwg.mxu0
    %1147 = vmatprep.subr.mxu0 0.0
    %1148 = vmatpush1.xpose.msra.mxu0 0.0
    %1149 = vmatprep.subr.mxu0 0.0
    %1150 = vmatpush1.xpose.msra.mxu0 0.0
    %1151 = vmatprep.subr.mxu0 0.0
    %1152 = vmatpush1.xpose.msra.mxu0 0.0
    %1153 = vmatprep.subr.mxu0 0.0
    %1154 = vmatpush1.xpose.msra.mxu0 0.0
    %1155 = vmatprep.subr.mxu0 0.0
    %1156 = vmatpush1.xpose.msra.mxu0 0.0
    %1157 = vmatprep.subr.mxu0 0.0
    %1158 = vmatpush1.xpose.msra.mxu0 0.0
    %1159 = vmatprep.subr.mxu0 0.0
    %1160 = vmatpush1.xpose.msra.mxu0 0.0
    %1161 = vmatprep.subr.mxu0 0.0
    %1162 = vmatpush1.xpose.msra.mxu0 0.0
    %1163 = vmatprep.subr.mxu0 0.0
    %1164 = vmatpush1.xpose.msra.mxu0 0.0
    %1165 = vmatprep.subr.mxu0 0.0
    %1166 = vmatpush1.xpose.msra.mxu0 0.0
    %1167 = vmatprep.subr.mxu0 0.0
    %1168 = vmatpush1.xpose.msra.mxu0 0.0
    %1169 = vmatprep.subr.mxu0 0.0
    %1170 = vmatpush1.xpose.msra.mxu0 0.0
    %1171 = vmatprep.subr.mxu0 0.0
    %1172 = vmatpush1.xpose.msra.mxu0 0.0
    %1173 = vmatprep.subr.mxu0 0.0
    %1174 = vmatpush1.xpose.msra.mxu0 0.0
    %1175 = vmatprep.subr.mxu0 0.0
    %1176 = vmatpush1.xpose.msra.mxu0 0.0
    %1177 = vmatprep.subr.mxu0 %v149
    %1178 = vmatpush1.xpose.msra.mxu0 %v69
    %1179 = vmatprep.subr.mxu0 0.0
    %1180 = vmatpush2.xpose.msra.mxu0 0.0
    %1181 = vmatprep.subr.mxu0 0.0
    %1182 = vmatpush2.xpose.msra.mxu0 0.0
    %1183 = vmatprep.subr.mxu0 0.0
    %1184 = vmatpush2.xpose.msra.mxu0 0.0
    %1185 = vmatprep.subr.mxu0 0.0
    %1186 = vmatpush2.xpose.msra.mxu0 0.0
    %1187 = vmatprep.subr.mxu0 0.0
    %1188 = vmatpush2.xpose.msra.mxu0 0.0
    %1189 = vmatprep.subr.mxu0 0.0
    %1190 = vmatpush2.xpose.msra.mxu0 0.0
    %1191 = vmatprep.subr.mxu0 0.0
    %1192 = vmatpush2.xpose.msra.mxu0 0.0
    %1193 = vmatprep.subr.mxu0 0.0
    %1194 = vmatpush2.xpose.msra.mxu0 0.0
    %1195 = vmatprep.subr.mxu0 0.0
    %1196 = vmatpush2.xpose.msra.mxu0 0.0
    %1197 = vmatprep.subr.mxu0 0.0
    %1198 = vmatpush2.xpose.msra.mxu0 0.0
    %1199 = vmatprep.subr.mxu0 0.0
    %1200 = vmatpush2.xpose.msra.mxu0 0.0
    %1201 = vmatprep.subr.mxu0 0.0
    %1202 = vmatpush2.xpose.msra.mxu0 0.0
    %1203 = vmatprep.subr.mxu0 0.0
    %1204 = vmatpush2.xpose.msra.mxu0 0.0
    %1205 = vmatprep.subr.mxu0 0.0
    %1206 = vmatpush2.xpose.msra.mxu0 0.0
    %1207 = vmatprep.subr.mxu0 0.0
    %1208 = vmatpush2.xpose.msra.mxu0 0.0
    %1209 = vmatprep.subr.mxu0 0.0
    %1210 = vmatpush2.xpose.msra.mxu0 0.0
    %1211 = vmatprep.mubr.f32.mxu0 %v101
    %1212 = vmatmul.mubr.f32.gmra.mxu0 %v53
    %v1213 = vpop.f32.mrf.mxu0
    %v1214 = vadd.f32 %v1144, %v1213
    %v1215 = vpop.f32.mrf.mxu0
    %1216 = vdwg.mxu0
    %1217 = vmatprep.subr.mxu0 0.0
    %1218 = vmatpush1.xpose.msra.mxu0 0.0
    %1219 = vmatprep.subr.mxu0 0.0
    %1220 = vmatpush1.xpose.msra.mxu0 0.0
    %1221 = vmatprep.subr.mxu0 0.0
    %1222 = vmatpush1.xpose.msra.mxu0 0.0
    %1223 = vmatprep.subr.mxu0 0.0
    %1224 = vmatpush1.xpose.msra.mxu0 0.0
    %1225 = vmatprep.subr.mxu0 0.0
    %1226 = vmatpush1.xpose.msra.mxu0 0.0
    %1227 = vmatprep.subr.mxu0 0.0
    %1228 = vmatpush1.xpose.msra.mxu0 0.0
    %1229 = vmatprep.subr.mxu0 0.0
    %1230 = vmatpush1.xpose.msra.mxu0 0.0
    %1231 = vmatprep.subr.mxu0 0.0
    %1232 = vmatpush1.xpose.msra.mxu0 0.0
    %1233 = vmatprep.subr.mxu0 0.0
    %1234 = vmatpush1.xpose.msra.mxu0 0.0
    %1235 = vmatprep.subr.mxu0 0.0
    %1236 = vmatpush1.xpose.msra.mxu0 0.0
    %1237 = vmatprep.subr.mxu0 0.0
    %1238 = vmatpush1.xpose.msra.mxu0 0.0
    %1239 = vmatprep.subr.mxu0 0.0
    %1240 = vmatpush1.xpose.msra.mxu0 0.0
    %1241 = vmatprep.subr.mxu0 0.0
    %1242 = vmatpush1.xpose.msra.mxu0 0.0
    %1243 = vmatprep.subr.mxu0 0.0
    %1244 = vmatpush1.xpose.msra.mxu0 0.0
    %1245 = vmatprep.subr.mxu0 0.0
    %1246 = vmatpush1.xpose.msra.mxu0 0.0
    %1247 = vmatprep.subr.mxu0 %v150
    %1248 = vmatpush1.xpose.msra.mxu0 %v70
    %1249 = vmatprep.subr.mxu0 0.0
    %1250 = vmatpush2.xpose.msra.mxu0 0.0
    %1251 = vmatprep.subr.mxu0 0.0
    %1252 = vmatpush2.xpose.msra.mxu0 0.0
    %1253 = vmatprep.subr.mxu0 0.0
    %1254 = vmatpush2.xpose.msra.mxu0 0.0
    %1255 = vmatprep.subr.mxu0 0.0
    %1256 = vmatpush2.xpose.msra.mxu0 0.0
    %1257 = vmatprep.subr.mxu0 0.0
    %1258 = vmatpush2.xpose.msra.mxu0 0.0
    %1259 = vmatprep.subr.mxu0 0.0
    %1260 = vmatpush2.xpose.msra.mxu0 0.0
    %1261 = vmatprep.subr.mxu0 0.0
    %1262 = vmatpush2.xpose.msra.mxu0 0.0
    %1263 = vmatprep.subr.mxu0 0.0
    %1264 = vmatpush2.xpose.msra.mxu0 0.0
    %1265 = vmatprep.subr.mxu0 0.0
    %1266 = vmatpush2.xpose.msra.mxu0 0.0
    %1267 = vmatprep.subr.mxu0 0.0
    %1268 = vmatpush2.xpose.msra.mxu0 0.0
    %1269 = vmatprep.subr.mxu0 0.0
    %1270 = vmatpush2.xpose.msra.mxu0 0.0
    %1271 = vmatprep.subr.mxu0 0.0
    %1272 = vmatpush2.xpose.msra.mxu0 0.0
    %1273 = vmatprep.subr.mxu0 0.0
    %1274 = vmatpush2.xpose.msra.mxu0 0.0
    %1275 = vmatprep.subr.mxu0 0.0
    %1276 = vmatpush2.xpose.msra.mxu0 0.0
    %1277 = vmatprep.subr.mxu0 0.0
    %1278 = vmatpush2.xpose.msra.mxu0 0.0
    %1279 = vmatprep.subr.mxu0 0.0
    %1280 = vmatpush2.xpose.msra.mxu0 0.0
    %1281 = vmatprep.mubr.f32.mxu0 %v102
    %1282 = vmatmul.mubr.f32.gmra.mxu0 %v54
    %v1283 = vpop.f32.mrf.mxu0
    %v1284 = vadd.f32 %v1214, %v1283
    %v1285 = vpop.f32.mrf.mxu0
    %1286 = vdwg.mxu0
    %p1287 = scmp.eq.s32.totalorder 0, 0
    // Predicated region
    $region22: #{tpu_custom_call.1} parent=1 // pred_check
      %p1288 = pneg %p1287
    $region23: #{tpu_custom_call.1} parent=1 // pred_check_branch
      %1290 = sbr.rel (%p1288) target = $region25
    $region24: #{tpu_custom_call.1} parent=1 // pred_region
      %vm1291 = vcmask 19456
      %1292 = vst.msk [vmem:[#allocation7] sm:$0xf] %vm1291, 0.0
    $region25: #{tpu_custom_call.1} parent=1 // pred_fallthru
      _
    %v1293 = vld [vmem:[#allocation7] sm:$0xf]
    %v1294 = vadd.f32 %v1293, %v1284
    %vm1295 = vcmask 19456
    %1296 = vst.msk [vmem:[#allocation7] sm:$0xf] %vm1295, %v1294
    // Predicated region
    $region26: #{tpu_custom_call.1} parent=1 // pred_check
      %p1297 = pneg %p1287
    $region27: #{tpu_custom_call.1} parent=1 // pred_check_branch
      %1299 = sbr.rel (%p1297) target = $region29
    $region28: #{tpu_custom_call.1} parent=1 // pred_region
      %v1300 = vld [vmem:[#allocation7] sm:$0xf]
      %v1301 = vld [vmem:[%s2] sm:$0x1]
      %v1303 = vlaneseq
      %v1304 = vshrl.u32 %v1303, 7
      %v1305 = vsub.s32 0, %v1304
      %v1306 = vrot.slane %v1301, %v1305
      %v1308 = vadd.f32 %v1300, %v1306
      %1309 = vst.msk [vmem:[#allocation7] sm:$0xf] %vm1295, %v1308
    $region29: #{tpu_custom_call.1} parent=1 // pred_fallthru
      _
    // Predicated region
    $region30: #{tpu_custom_call.1} parent=1 // pred_check
      _
    $region31: #{tpu_custom_call.1} parent=1 // pred_check_branch
      %1311 = sbr.rel (0) target = $region33
    $region32: #{tpu_custom_call.1} parent=1 // pred_region
      %s1313 = ssub.s32 64, 64
      %1314 = vsyncadd [#allocation4], %s1313
      %s1316 = sshll.u32 [#allocation7], 4
      %s1317 = int_to_ptr.vmem [resolvable:$true] %s1316
      %1319 = dma.vmem_to_hbm [thread:$0]  %s1317, 64, %s3, [#allocation4]
    $region33: #{tpu_custom_call.1} parent=1 // pred_fallthru
      _
    // Predicated region
    $region34: #{tpu_custom_call.1} parent=1 // pred_check
      _
    $region35: #{tpu_custom_call.1} parent=1 // pred_check_branch
      %1321 = sbr.rel (0) target = $region37
    $region36: #{tpu_custom_call.1} parent=1 // pred_region
      %1322 = dma.done [#allocation4], 64
    $region37: #{tpu_custom_call.1} parent=1 // pred_fallthru
      _
    %1323 = vsyncpa [#allocation3], 1
    %1324 = vsyncpa [#allocation6], 1
    %1325 = vsyncpa [#allocation4], 1

</llo_original>
